<compile_context>
chip_gen: v5e
topology: v5e:2x2
jax: 0.10.0
libtpu: 0.0.40
codegen_flags: <defaults>
</compile_context>

<pallas_src>
import jax
import jax.numpy as jnp
from jax.experimental import pallas as pl
from jax.experimental.pallas import tpu as pltpu

BN_EPS = 1e-3


def _round_up(x, m):
    return (x + m - 1) // m * m


def _make_kernel(inv_m):
    """inv_m = 1 / (true number of spatial positions), baked in statically."""

    def kernel(x_ref, s_ref, w_ref, g_ref, b_ref, o_ref):
        # x_ref: (C_in_pad, M_pad)     bf16  input, channel-major (zeros in pad)
        # s_ref: (C_in_pad, 1)         f32   squeeze-excite logits
        # w_ref: (cout_blk, C_in_pad)  bf16  1x1-conv weight block
        # g_ref, b_ref: (cout_blk, 1)  f32   BN affine params
        # o_ref: (cout_blk, M_pad)     f32
        gate = jax.nn.sigmoid(s_ref[...])                       # EUP, (C_in,1)
        gated = (x_ref[...] * gate).astype(jnp.bfloat16)        # lane-bcast mul
        # 1x1 conv == (C_out, C_in) x (C_in, M) matmul on the MXU, f32 acc.
        y = jnp.dot(w_ref[...], gated,
                    preferred_element_type=jnp.float32)         # (cout, M) f32

        # Single-pass BN sufficient statistics (padded M columns of `gated`
        # are zero, so they contribute nothing; divide by the true M).
        sums = jnp.sum(y, axis=1, keepdims=True)                # (cout, 1)
        sumsq = jnp.sum(y * y, axis=1, keepdims=True)           # (cout, 1)
        mean = sums * inv_m
        var = jnp.maximum(sumsq * inv_m - mean * mean, 0.0)     # biased var

        # Fold BN into a single scale/shift:  o = y * a + b2
        a = jax.lax.rsqrt(var + BN_EPS) * g_ref[...]
        b2 = b_ref[...] - mean * a
        o_ref[...] = y * a + b2

    return kernel


def fused_sigmoid_mul_conv1x1_bn(x_nchw, s_nc11, w_oi11, gamma, beta):
    """x_nchw: (1, C_in, H, W), s_nc11: (1, C_in, 1, 1), w: (C_out, C_in, 1, 1)."""
    N, C_in, H, W = x_nchw.shape
    # TODO(synk): per-sample SE gates / batched BN stats for N > 1 (source module
    #             runs with N == 1, so we guard instead of faking it).
    assert N == 1, "kernel assumes batch size 1 (as in the source module)"
    C_out = w_oi11.shape[0]
    M = H * W

    # Channel-major 2D views -- NCHW with N==1 is already (C, H*W): no transposes.
    x2d = x_nchw.reshape(C_in, M)
    s2d = s_nc11.reshape(C_in, 1)
    w2d = w_oi11.reshape(C_out, C_in)
    g2d = gamma.reshape(C_out, 1)
    b2d = beta.reshape(C_out, 1)

    # TPU-friendly padding (zeros do not perturb the conv or the BN sums).
    M_pad = _round_up(M, 128)                     # lane axis of x / output
    C_in_pad = _round_up(C_in, 8)                 # sublane axis of x
    cout_blk = min(128, _round_up(C_out, 8))      # output-channel block
    C_out_pad = _round_up(C_out, cout_blk)
    n_blocks = C_out_pad // cout_blk

    x2d = jnp.pad(x2d, ((0, C_in_pad - C_in), (0, M_pad - M))).astype(jnp.bfloat16)
    s2d = jnp.pad(s2d, ((0, C_in_pad - C_in), (0, 0))).astype(jnp.float32)
    w2d = jnp.pad(w2d, ((0, C_out_pad - C_out),
                        (0, C_in_pad - C_in))).astype(jnp.bfloat16)
    g2d = jnp.pad(g2d, ((0, C_out_pad - C_out), (0, 0))).astype(jnp.float32)
    b2d = jnp.pad(b2d, ((0, C_out_pad - C_out), (0, 0))).astype(jnp.float32)

    cost = pl.CostEstimate(
        flops=2 * M * C_in * C_out,
        transcendentals=C_in,
        bytes_accessed=int(x2d.size * 2 + w2d.size * 2 + s2d.size * 4
                           + g2d.size * 4 + b2d.size * 4
                           + C_out_pad * M_pad * 4),
    )

    out2d = pl.pallas_call(
        _make_kernel(1.0 / float(M)),
        out_shape=jax.ShapeDtypeStruct((C_out_pad, M_pad), jnp.float32),
        grid_spec=pltpu.PrefetchScalarGridSpec(
            num_scalar_prefetch=0,
            grid=(n_blocks,),
            in_specs=[
                pl.BlockSpec((C_in_pad, M_pad), lambda j: (0, 0)),    # x (stays resident)
                pl.BlockSpec((C_in_pad, 1), lambda j: (0, 0)),        # SE logits
                pl.BlockSpec((cout_blk, C_in_pad), lambda j: (j, 0)), # weight block
                pl.BlockSpec((cout_blk, 1), lambda j: (j, 0)),        # gamma block
                pl.BlockSpec((cout_blk, 1), lambda j: (j, 0)),        # beta block
            ],
            out_specs=pl.BlockSpec((cout_blk, M_pad), lambda j: (j, 0)),
        ),
        compiler_params=pltpu.CompilerParams(
            dimension_semantics=("parallel",),   # C_out blocks are independent
        ),
        cost_estimate=cost,
    )(x2d, s2d, w2d, g2d, b2d)

    # (C_out, M) is already channel-major == NCHW for N == 1.
    return out2d[:C_out, :M].reshape(1, C_out, H, W)


def _reference(x_nchw, s_nc11, w_oi11, gamma, beta):
    """Pure-JAX f32 reference mirroring the PyTorch module (training-mode BN)."""
    gated = jax.nn.sigmoid(s_nc11) * x_nchw                       # (N,C_in,H,W)
    y = jnp.einsum("nchw,oc->nohw", gated, w_oi11[:, :, 0, 0])    # 1x1 conv
    mean = jnp.mean(y, axis=(0, 2, 3), keepdims=True)
    var = jnp.mean((y - mean) ** 2, axis=(0, 2, 3), keepdims=True)
    inv = jax.lax.rsqrt(var + BN_EPS)
    return (y - mean) * inv * gamma.reshape(1, -1, 1, 1) + beta.reshape(1, -1, 1, 1)


if __name__ == "__main__":
    # Small shapes consistent with the module (original: 1x1344x14x14 -> 224 ch).
    N, C_in, C_out, H, W = 1, 32, 16, 8, 8

    key = jax.random.PRNGKey(0)
    k1, k2, k3, k4, k5 = jax.random.split(key, 5)
    x547 = jax.random.normal(k1, (N, C_in, H, W), dtype=jnp.float32)
    x551 = jax.random.normal(k2, (N, C_in, 1, 1), dtype=jnp.float32)
    conv_w = 0.1 * jax.random.normal(k3, (C_out, C_in, 1, 1), dtype=jnp.float32)
    bn_gamma = 1.0 + 0.1 * jax.random.normal(k4, (C_out,), dtype=jnp.float32)
    bn_beta = 0.1 * jax.random.normal(k5, (C_out,), dtype=jnp.float32)

    out = jax.block_until_ready(
        fused_sigmoid_mul_conv1x1_bn(x547, x551, conv_w, bn_gamma, bn_beta))

    ref = _reference(x547, x551, conv_w, bn_gamma, bn_beta)
    assert out.shape == (N, C_out, H, W)
    # bf16 matmul inputs -> relaxed tolerance vs the f32 reference.
    max_err = float(jnp.max(jnp.abs(out - ref)))
    assert jnp.allclose(out, ref, atol=3e-2, rtol=3e-2), (
        f"mismatch vs reference: max abs err {max_err}")

    print("KERNEL_OK")
</pallas_src>

<mosaic_0001>
module attributes {stable_mosaic.version = 11 : i64} {
  func.func @kernel(%arg0: i32, %arg1: memref<32x128xbf16, #tpu.memory_space<vmem>>, %arg2: memref<32x1xf32, #tpu.memory_space<vmem>>, %arg3: memref<16x32xbf16, #tpu.memory_space<vmem>>, %arg4: memref<16x1xf32, #tpu.memory_space<vmem>>, %arg5: memref<16x1xf32, #tpu.memory_space<vmem>>, %arg6: memref<16x128xf32, #tpu.memory_space<vmem>>) attributes {dimension_semantics = [#tpu.dimension_semantics<parallel>], iteration_bounds = array<i64: 1>, scalar_prefetch = 0 : i64, scratch_operands = 0 : i64, tpu.core_type = #tpu.core_type<tc>, window_params = [{pipeline_mode = #tpu.pipeline_mode<synchronous>, transform_indices = @transform_0, window_bounds = array<i64: 32, 128>}, {pipeline_mode = #tpu.pipeline_mode<synchronous>, transform_indices = @transform_1, window_bounds = array<i64: 32, 1>}, {transform_indices = @transform_2, window_bounds = array<i64: 16, 32>}, {transform_indices = @transform_3, window_bounds = array<i64: 16, 1>}, {transform_indices = @transform_4, window_bounds = array<i64: 16, 1>}, {transform_indices = @transform_5, window_bounds = array<i64: 16, 128>}]} {
    %c0 = arith.constant 0 : index
    %c0_0 = arith.constant 0 : index
    %0 = vector.load %arg2[%c0, %c0_0] : memref<32x1xf32, #tpu.memory_space<vmem>>, vector<32x1xf32>
    %1 = arith.negf %0 : vector<32x1xf32>
    %2 = math.exp %1 : vector<32x1xf32>
    %cst = arith.constant 1.000000e+00 : f32
    %3 = vector.broadcast %cst : f32 to vector<32x1xf32>
    %4 = arith.addf %3, %2 : vector<32x1xf32>
    %5 = arith.divf %3, %4 : vector<32x1xf32>
    %c0_1 = arith.constant 0 : index
    %c0_2 = arith.constant 0 : index
    %6 = vector.load %arg1[%c0_1, %c0_2] : memref<32x128xbf16, #tpu.memory_space<vmem>>, vector<32x128xbf16>
    %7 = arith.extf %6 : vector<32x128xbf16> to vector<32x128xf32>
    %8 = vector.broadcast %5 : vector<32x1xf32> to vector<32x128xf32>
    %9 = arith.mulf %7, %8 : vector<32x128xf32>
    %10 = arith.truncf %9 : vector<32x128xf32> to vector<32x128xbf16>
    %c0_3 = arith.constant 0 : index
    %c0_4 = arith.constant 0 : index
    %11 = vector.load %arg3[%c0_3, %c0_4] : memref<16x32xbf16, #tpu.memory_space<vmem>>, vector<16x32xbf16>
    %cst_5 = arith.constant dense<0.000000e+00> : vector<16x128xf32>
    %12 = tpu.matmul %11, %10, %cst_5 {dimension_numbers = #tpu.dot_dimension_numbers<[1], [0], [0], [1], [0, 0, 1, 1], [], []>} : vector<16x32xbf16>, vector<32x128xbf16>, vector<16x128xf32> -> vector<16x128xf32>
    %cst_6 = arith.constant dense<0.000000e+00> : vector<16xf32>
    %13 = vector.multi_reduction <add>, %12, %cst_6 [1] : vector<16x128xf32> to vector<16xf32>
    %14 = vector.shape_cast %13 : vector<16xf32> to vector<16x1xf32>
    %15 = arith.mulf %12, %12 : vector<16x128xf32>
    %cst_7 = arith.constant dense<0.000000e+00> : vector<16xf32>
    %16 = vector.multi_reduction <add>, %15, %cst_7 [1] : vector<16x128xf32> to vector<16xf32>
    %17 = vector.shape_cast %16 : vector<16xf32> to vector<16x1xf32>
    %cst_8 = arith.constant 1.562500e-02 : f32
    %18 = vector.broadcast %cst_8 : f32 to vector<16x1xf32>
    %19 = arith.mulf %14, %18 : vector<16x1xf32>
    %cst_9 = arith.constant 1.562500e-02 : f32
    %20 = vector.broadcast %cst_9 : f32 to vector<16x1xf32>
    %21 = arith.mulf %17, %20 : vector<16x1xf32>
    %22 = arith.mulf %19, %19 : vector<16x1xf32>
    %23 = arith.subf %21, %22 : vector<16x1xf32>
    %cst_10 = arith.constant 0.000000e+00 : f32
    %24 = vector.broadcast %cst_10 : f32 to vector<16x1xf32>
    %25 = arith.maximumf %23, %24 : vector<16x1xf32>
    %cst_11 = arith.constant 1.000000e-03 : f32
    %26 = vector.broadcast %cst_11 : f32 to vector<16x1xf32>
    %27 = arith.addf %25, %26 : vector<16x1xf32>
    %28 = math.rsqrt %27 : vector<16x1xf32>
    %c0_12 = arith.constant 0 : index
    %c0_13 = arith.constant 0 : index
    %29 = vector.load %arg4[%c0_12, %c0_13] : memref<16x1xf32, #tpu.memory_space<vmem>>, vector<16x1xf32>
    %30 = arith.mulf %28, %29 : vector<16x1xf32>
    %c0_14 = arith.constant 0 : index
    %c0_15 = arith.constant 0 : index
    %31 = vector.load %arg5[%c0_14, %c0_15] : memref<16x1xf32, #tpu.memory_space<vmem>>, vector<16x1xf32>
    %32 = arith.mulf %19, %30 : vector<16x1xf32>
    %33 = arith.subf %31, %32 : vector<16x1xf32>
    %34 = vector.broadcast %30 : vector<16x1xf32> to vector<16x128xf32>
    %35 = arith.mulf %12, %34 : vector<16x128xf32>
    %36 = vector.broadcast %33 : vector<16x1xf32> to vector<16x128xf32>
    %37 = arith.addf %35, %36 : vector<16x128xf32>
    %c0_16 = arith.constant 0 : index
    %c0_17 = arith.constant 0 : index
    %38 = vector.load %arg6[%c0_16, %c0_17] : memref<16x128xf32, #tpu.memory_space<vmem>>, vector<16x128xf32>
    tpu.vector_store %arg6[%c0_16, %c0_17], %37 {strides = array<i32>} : memref<16x128xf32, #tpu.memory_space<vmem>>, vector<16x128xf32>,
    return
  }
  func.func @transform_0(%arg0: i32) -> (i32, i32) {
    %c0_i32 = arith.constant 0 : i32
    %c0_i32_0 = arith.constant 0 : i32
    %c0_i32_1 = arith.constant 0 : i32
    return %c0_i32, %c0_i32_0 : i32, i32
  }
  func.func @transform_1(%arg0: i32) -> (i32, i32) {
    %c0_i32 = arith.constant 0 : i32
    %c0_i32_0 = arith.constant 0 : i32
    %c0_i32_1 = arith.constant 0 : i32
    return %c0_i32, %c0_i32_0 : i32, i32
  }
  func.func @transform_2(%arg0: i32) -> (i32, i32) {
    %c0_i32 = arith.constant 0 : i32
    %c0_i32_0 = arith.constant 0 : i32
    return %arg0, %c0_i32 : i32, i32
  }
  func.func @transform_3(%arg0: i32) -> (i32, i32) {
    %c0_i32 = arith.constant 0 : i32
    %c0_i32_0 = arith.constant 0 : i32
    return %arg0, %c0_i32 : i32, i32
  }
  func.func @transform_4(%arg0: i32) -> (i32, i32) {
    %c0_i32 = arith.constant 0 : i32
    %c0_i32_0 = arith.constant 0 : i32
    return %arg0, %c0_i32 : i32, i32
  }
  func.func @transform_5(%arg0: i32) -> (i32, i32) {
    %c0_i32 = arith.constant 0 : i32
    %c0_i32_0 = arith.constant 0 : i32
    return %arg0, %c0_i32 : i32, i32
  }
}

</mosaic_0001>

<llo_original>
// kernel: tpu_custom_call.1
$region0: #{tpu_custom_call.1}
  #allocation0 [shape = 'u32[]', space=smem, size = 0x4, offset = 0x4, fixed_abs, tag = 'smem constant byte address 0x4 - core index']
  #allocation1 [shape = 'u32[72,128]{1,0:T(1,128)}', space=vmem, size = 0x9000, scoped, tag = 'internal scratch']
  %s0 = inlined_call_operand.vmem [shape: bf16[32,128], index: 0, kind: input, shape index: {}]
  %s1 = inlined_call_operand.vmem [shape: f32[32,1], index: 1, kind: input, shape index: {}]
  %s2 = inlined_call_operand.vmem [shape: bf16[16,32], index: 2, kind: input, shape index: {}]
  %s3 = inlined_call_operand.vmem [shape: f32[16,1], index: 3, kind: input, shape index: {}]
  %s4 = inlined_call_operand.vmem [shape: f32[16,1], index: 4, kind: input, shape index: {}]
  %s5 = inlined_call_operand.hbm [shape: f32[16,128], index: 5, kind: output, shape index: {}]
  %s6 = sld [smem:[#allocation0]]
  $region30: #{tpu_custom_call.1} parent=0
    _
  %s8 = ssub.s32 1, %s6
  %s9 = scalar_select 0, %s8, %s6
  $region1: #{tpu_custom_call.1} parent=0
    #allocation2 [shape = 'u8[8192]{0}', space=vmem, size = 0x2000, scoped, tag = 'output window, operand 0, single buffered']
    #allocation3 [shape = 's32[1]{0}', space=sflag, size = 0x4, scoped, tag = 'scoped memory for tpu_custom_call.1']
    %10 = vsyncpa [#allocation3], 0
    // Predicated region
    $region2: #{tpu_custom_call.1} parent=1 // pred_check
      _
    $region3: #{tpu_custom_call.1} parent=1 // pred_check_branch
      %12 = sbr.rel (0) target = $region5
    $region4: #{tpu_custom_call.1} parent=1 // pred_region
      _
    $region5: #{tpu_custom_call.1} parent=1 // pred_fallthru
      _
    // Predicated region
    $region6: #{tpu_custom_call.1} parent=1 // pred_check
      _
    $region7: #{tpu_custom_call.1} parent=1 // pred_check_branch
      %14 = sbr.rel (0) target = $region9
    $region8: #{tpu_custom_call.1} parent=1 // pred_region
      _
    $region9: #{tpu_custom_call.1} parent=1 // pred_fallthru
      _
    // Predicated region
    $region10: #{tpu_custom_call.1} parent=1 // pred_check
      _
    $region11: #{tpu_custom_call.1} parent=1 // pred_check_branch
      %16 = sbr.rel (0) target = $region13
    $region12: #{tpu_custom_call.1} parent=1 // pred_region
      _
    $region13: #{tpu_custom_call.1} parent=1 // pred_fallthru
      _
    // Predicated region
    $region14: #{tpu_custom_call.1} parent=1 // pred_check
      _
    $region15: #{tpu_custom_call.1} parent=1 // pred_check_branch
      %18 = sbr.rel (0) target = $region17
    $region16: #{tpu_custom_call.1} parent=1 // pred_region
      _
    $region17: #{tpu_custom_call.1} parent=1 // pred_fallthru
      _
    // Predicated region
    $region18: #{tpu_custom_call.1} parent=1 // pred_check
      _
    $region19: #{tpu_custom_call.1} parent=1 // pred_check_branch
      %20 = sbr.rel (0) target = $region21
    $region20: #{tpu_custom_call.1} parent=1 // pred_region
      _
    $region21: #{tpu_custom_call.1} parent=1 // pred_fallthru
      _
    %v22 = vld [vmem:[%s1] sm:$0xff]
    %v23 = vld [vmem:[%s1 + $0x8] sm:$0xff]
    %v24 = vld [vmem:[%s1 + $0x10] sm:$0xff]
    %v25 = vld [vmem:[%s1 + $0x18] sm:$0xff]
    %v26 = vxor.u32 %v22, 2147483648
    %v27 = vxor.u32 %v23, 2147483648
    %v28 = vxor.u32 %v24, 2147483648
    %v29 = vxor.u32 %v25, 2147483648
    %v30 = vmul.f32 %v26, 1.442695
    %v31 = vpow.pop %v30
    %v32 = vmul.f32 %v27, 1.442695
    %v33 = vpow.pop %v32
    %v34 = vmul.f32 %v28, 1.442695
    %v35 = vpow.pop %v34
    %v36 = vmul.f32 %v29, 1.442695
    %v37 = vpow.pop %v36
    %v38 = vadd.f32 %v31, 1.0
    %v39 = vadd.f32 %v33, 1.0
    %v40 = vadd.f32 %v35, 1.0
    %v41 = vadd.f32 %v37, 1.0
    %v42 = vrcp.pop %v38
    %v43 = vmul.f32 %v38, %v42
    %v44 = vsub.f32 1.0, %v43
    %v45 = vmul.f32 %v42, %v44
    %v46 = vadd.f32 %v42, %v45
    %vm47 = vweird.f32 %v38
    %vm48 = vweird.f32 %v42
    %vm49 = vmor %vm47, %vm48
    %v50 = vsel %vm49, %v42, %v46
    %v51 = vand.u32 2147483647, %v38
    %vm52 = vcmp.eq.f32.partialorder %v51, 8.507059e+37
    %v53 = vand.u32 %v38, 2147483648
    %v54 = vor.u32 1.1754944e-38, %v53
    %v55 = vsel %vm52, %v54, %v50
    %v56 = vmul.f32 1.0, %v55
    %v57 = vrcp.pop %v39
    %v58 = vmul.f32 %v39, %v57
    %v59 = vsub.f32 1.0, %v58
    %v60 = vmul.f32 %v57, %v59
    %v61 = vadd.f32 %v57, %v60
    %vm62 = vweird.f32 %v39
    %vm63 = vweird.f32 %v57
    %vm64 = vmor %vm62, %vm63
    %v65 = vsel %vm64, %v57, %v61
    %v66 = vand.u32 2147483647, %v39
    %vm67 = vcmp.eq.f32.partialorder %v66, 8.507059e+37
    %v68 = vand.u32 %v39, 2147483648
    %v69 = vor.u32 1.1754944e-38, %v68
    %v70 = vsel %vm67, %v69, %v65
    %v71 = vmul.f32 1.0, %v70
    %v72 = vrcp.pop %v40
    %v73 = vmul.f32 %v40, %v72
    %v74 = vsub.f32 1.0, %v73
    %v75 = vmul.f32 %v72, %v74
    %v76 = vadd.f32 %v72, %v75
    %vm77 = vweird.f32 %v40
    %vm78 = vweird.f32 %v72
    %vm79 = vmor %vm77, %vm78
    %v80 = vsel %vm79, %v72, %v76
    %v81 = vand.u32 2147483647, %v40
    %vm82 = vcmp.eq.f32.partialorder %v81, 8.507059e+37
    %v83 = vand.u32 %v40, 2147483648
    %v84 = vor.u32 1.1754944e-38, %v83
    %v85 = vsel %vm82, %v84, %v80
    %v86 = vmul.f32 1.0, %v85
    %v87 = vrcp.pop %v41
    %v88 = vmul.f32 %v41, %v87
    %v89 = vsub.f32 1.0, %v88
    %v90 = vmul.f32 %v87, %v89
    %v91 = vadd.f32 %v87, %v90
    %vm92 = vweird.f32 %v41
    %vm93 = vweird.f32 %v87
    %vm94 = vmor %vm92, %vm93
    %v95 = vsel %vm94, %v87, %v91
    %v96 = vand.u32 2147483647, %v41
    %vm97 = vcmp.eq.f32.partialorder %v96, 8.507059e+37
    %v98 = vand.u32 %v41, 2147483648
    %v99 = vor.u32 1.1754944e-38, %v98
    %v100 = vsel %vm97, %v99, %v95
    %v101 = vmul.f32 1.0, %v100
    %v102 = vld [vmem:[%s0] sm:$0xf]
    %v103 = vld [vmem:[%s0 + $0x4] sm:$0xf]
    %v104 = vld [vmem:[%s0 + $0x8] sm:$0xf]
    %v105 = vld [vmem:[%s0 + $0xc] sm:$0xf]
    %v106 = vunpack.c.l.bf16 %v102
    %v107 = vunpack.c.l.bf16 %v103
    %v108 = vunpack.c.l.bf16 %v104
    %v109 = vunpack.c.l.bf16 %v105
    %111 = vset.pattern.permute.xlu0 0
    %112 = vperm.xlu0 %111, %v56
    %v113 = vpop.permute.xlu0 %112
    %116 = vset.pattern.permute.xlu0 0
    %117 = vperm.xlu0 %116, %v71
    %v118 = vpop.permute.xlu0 %117
    %121 = vset.pattern.permute.xlu0 0
    %122 = vperm.xlu0 %121, %v86
    %v123 = vpop.permute.xlu0 %122
    %126 = vset.pattern.permute.xlu0 0
    %127 = vperm.xlu0 %126, %v101
    %v128 = vpop.permute.xlu0 %127
    %v130 = vmul.f32 %v106, %v113
    %v131 = vmul.f32 %v107, %v118
    %v132 = vmul.f32 %v108, %v123
    %v133 = vmul.f32 %v109, %v128
    %v134 = vpack.c.bf16 %v131, %v130
    %v135 = vpack.c.bf16 %v133, %v132
    %v136 = vld [vmem:[%s2] sm:$0xf]
    %v137 = vld [vmem:[%s2 + $0x4] sm:$0xf]
    %v140 = vunpack.c.l.b16 %v136
    %v141 = vunpack.c.l.b16 %v137
    %v142 = vpack.c.b16 %v141, %v140
    %vm143 = vcmask 261120
    %v145 = vsel %vm143, %v142, 0
    %147 = vmatpush.bf16.msra.mxu0 0
    %148 = vmatpush.bf16.msra.mxu0 0
    %149 = vmatpush.bf16.msra.mxu0 0
    %150 = vmatpush.bf16.msra.mxu0 0
    %151 = vmatpush.bf16.msra.mxu0 0
    %152 = vmatpush.bf16.msra.mxu0 0
    %153 = vmatpush.bf16.msra.mxu0 %v135
    %154 = vmatpush.bf16.msra.mxu0 %v134
    %155 = vmatmul.bf16.gmra.mxu0 %v145
    %v156 = vpop.f32.mrf.mxu0
    %v157 = vadd.f32 0.0, %v156
    %v158 = vpop.f32.mrf.mxu0
    %v159 = vadd.f32 0.0, %v158
    %160 = vdwg.mxu0
    %161 = vadd.xlane.f32.xlu0 %v157
    %v162 = vpop.xlane.xlu0 %161
    %163 = vadd.xlane.f32.xlu0 %v159
    %v164 = vpop.xlane.xlu0 %163
    %v165 = vmul.f32 %v157, %v157
    %v166 = vmul.f32 %v159, %v159
    %167 = vadd.xlane.f32.xlu0 %v165
    %v168 = vpop.xlane.xlu0 %167
    %169 = vadd.xlane.f32.xlu0 %v166
    %v170 = vpop.xlane.xlu0 %169
    %v171 = vmul.f32 %v162, 0.015625
    %v172 = vmul.f32 %v164, 0.015625
    %v173 = vmul.f32 %v168, 0.015625
    %v174 = vmul.f32 %v170, 0.015625
    %v175 = vmul.f32 %v171, %v171
    %v176 = vmul.f32 %v172, %v172
    %v177 = vsub.f32 %v173, %v175
    %v178 = vsub.f32 %v174, %v176
    %v179 = vmax.f32 %v177, 0.0
    %v180 = vmax.f32 %v178, 0.0
    %v181 = vadd.f32 %v179, 0.001
    %v182 = vadd.f32 %v180, 0.001
    %v183 = vrsqrt.pop %v181
    %v184 = vmul.f32 %v183, %v181
    %v185 = vmul.f32 %v184, %v183
    %v186 = vmul.f32 0.5, %v185
    %v187 = vsub.f32 1.5, %v186
    %v188 = vmul.f32 %v183, %v187
    %vm189 = vweird.f32 %v181
    %vm190 = vweird.f32 %v183
    %vm191 = vmor %vm189, %vm190
    %v192 = vsel %vm191, %v183, %v188
    %v193 = vrsqrt.pop %v182
    %v194 = vmul.f32 %v193, %v182
    %v195 = vmul.f32 %v194, %v193
    %v196 = vmul.f32 0.5, %v195
    %v197 = vsub.f32 1.5, %v196
    %v198 = vmul.f32 %v193, %v197
    %vm199 = vweird.f32 %v182
    %vm200 = vweird.f32 %v193
    %vm201 = vmor %vm199, %vm200
    %v202 = vsel %vm201, %v193, %v198
    %v203 = vld [vmem:[%s3] sm:$0xff]
    %v204 = vld [vmem:[%s3 + $0x8] sm:$0xff]
    %v205 = vmul.f32 %v192, %v203
    %v206 = vmul.f32 %v202, %v204
    %v207 = vld [vmem:[%s4] sm:$0xff]
    %v208 = vld [vmem:[%s4 + $0x8] sm:$0xff]
    %v209 = vmul.f32 %v171, %v205
    %v210 = vmul.f32 %v172, %v206
    %v211 = vsub.f32 %v207, %v209
    %v212 = vsub.f32 %v208, %v210
    %214 = vset.pattern.permute.xlu0 0
    %215 = vperm.xlu0 %214, %v205
    %v216 = vpop.permute.xlu0 %215
    %219 = vset.pattern.permute.xlu0 0
    %220 = vperm.xlu0 %219, %v206
    %v221 = vpop.permute.xlu0 %220
    %v223 = vmul.f32 %v157, %v216
    %v224 = vmul.f32 %v159, %v221
    %226 = vset.pattern.permute.xlu0 0
    %227 = vperm.xlu0 %226, %v211
    %v228 = vpop.permute.xlu0 %227
    %231 = vset.pattern.permute.xlu0 0
    %232 = vperm.xlu0 %231, %v212
    %v233 = vpop.permute.xlu0 %232
    %v235 = vadd.f32 %v223, %v228
    %v236 = vadd.f32 %v224, %v233
    %237 = vst [vmem:[#allocation2] sm:$0xff] %v235
    %238 = vst [vmem:[#allocation2 + $0x8] sm:$0xff] %v236
    // Predicated region
    $region22: #{tpu_custom_call.1} parent=1 // pred_check
      _
    $region23: #{tpu_custom_call.1} parent=1 // pred_check_branch
      %240 = sbr.rel (0) target = $region25
    $region24: #{tpu_custom_call.1} parent=1 // pred_region
      %242 = vsyncadd [#allocation3], 0
      %s243 = sshll.u32 [#allocation2], 4
      %s244 = int_to_ptr.vmem [resolvable:$true] %s243
      %s245 = sshll.u32 %s5, 4
      %s246 = int_to_ptr.hbm [resolvable:$true] %s245
      %251 = dma.vmem_to_hbm [thread:$0]  %s244, 256, %s246, [#allocation3], 128, 128, 8
    $region25: #{tpu_custom_call.1} parent=1 // pred_fallthru
      _
    // Predicated region
    $region26: #{tpu_custom_call.1} parent=1 // pred_check
      _
    $region27: #{tpu_custom_call.1} parent=1 // pred_check_branch
      %253 = sbr.rel (0) target = $region29
    $region28: #{tpu_custom_call.1} parent=1 // pred_region
      %255 = dma.done [#allocation3], 256
    $region29: #{tpu_custom_call.1} parent=1 // pred_fallthru
      _
    %256 = vsyncpa [#allocation3], 1

</llo_original>
